<compile_context>
chip_gen: v6e
topology: v6e:2x2x1
jax: 0.10.0
libtpu: 0.0.40
codegen_flags: <defaults>
</compile_context>

<pallas_src>
import functools

import jax
import jax.numpy as jnp
from jax.experimental import pallas as pl
from jax.experimental.pallas import tpu as pltpu


def _round_up(x, m):
    return (x + m - 1) // m * m


def _tpu_generation():
    """Coarse TPU generation from device_kind (tile/dtype tuning only)."""
    try:
        kind = jax.devices()[0].device_kind.lower()
    except Exception:
        return 6
    for tag, gen in (("v2", 2), ("v3", 3), ("v4", 4), ("v5", 5), ("v6", 6)):
        if tag in kind:
            return gen
    return 7  # v7x reports e.g. "TPU7x"; unknown -> assume newest (smallest VMEM)


def _decoder_fwd_kernel(ref_ref, code_ref, w1f_ref, w1z_ref, w2_ref, b2_ref,
                        o_ref, acc_ref, *, bf16_tanh):
    # Grid = (batch tiles [parallel], hidden blocks [arbitrary, streamed]).
    # ref_ref : (TB, F)  bf16      code_ref: (TB, Z+1) bf16  (last col = ones -> b1)
    # w1f_ref : (F, TH)  bf16      w1z_ref : (Z+1, TH) bf16  (last row = b1)
    # w2_ref  : (TH, Fp) bf16      b2_ref  : (1, Fp)  f32
    # o_ref   : (TB, Fp)           acc_ref : (TB, Fp) f32 scratch (persists over k)
    k = pl.program_id(1)

    @pl.when(k == 0)
    def _():
        acc_ref[...] = jnp.zeros_like(acc_ref)

    # first_linear for this hidden block (bias folded into the code matmul).
    h = jnp.dot(ref_ref[...], w1f_ref[...], preferred_element_type=jnp.float32)
    h = h + jnp.dot(code_ref[...], w1z_ref[...], preferred_element_type=jnp.float32)

    if bf16_tanh:
        # v6e / v7x: bf16 EUP roughly doubles tanh throughput; second matmul
        # consumes bf16 anyway.
        h = jnp.tanh(h.astype(jnp.bfloat16))
    else:
        # v5e and older: no bf16 EUP/VPU -> keep tanh in f32, cast after.
        h = jnp.tanh(h).astype(jnp.bfloat16)

    # final_linear, accumulated over hidden blocks in f32.
    acc_ref[...] += jnp.dot(h, w2_ref[...], preferred_element_type=jnp.float32)

    @pl.when(k == pl.num_programs(1) - 1)
    def _():
        o_ref[...] = (acc_ref[...] + b2_ref[...]).astype(o_ref.dtype)


def decoder_forward(reference_features, code, params, *, block_b=None, block_h=1024):
    """Fused Decoder.forward: tanh(cat([ref, code], 1) @ W1 + b1) @ W2 + b2."""
    w1f, w1z, w2, b2 = params["w1f"], params["w1z"], params["w2"], params["b2"]
    B, F = reference_features.shape          # F == feature_dim (also the output width)
    Z = code.shape[1]
    Z1 = w1z.shape[0]                        # z_dim + 1 (b1 folded into last row)
    assert Z1 == Z + 1, "params['w1z'] must carry b1 as its last row"
    Hp = w1f.shape[1]                        # padded hidden  (multiple of 128)
    Fp = w2.shape[1]                         # padded outputs (multiple of 128)
    out_dtype = reference_features.dtype

    gen = _tpu_generation()
    bf16_tanh = gen >= 6

    # ---- hidden-streaming block: multiple of 128 that divides Hp ----------
    TH = min(Hp, max(128, (block_h // 128) * 128))
    while Hp % TH:
        TH -= 128
    nk = Hp // TH

    # ---- batch tile ---------------------------------------------------------
    if block_b is not None:
        cap = block_b
    elif gen <= 5:
        cap = 128                             # 4x128^2 MXU; halves act/hidden VMEM
    elif gen >= 7:
        cap = 128 if Hp >= 4096 else 256      # keep TB*Hp temporaries inside 64 MiB VMEM
    else:
        cap = 256                             # v6e: match 2x256^2 MXU M-dim
    if B <= cap:
        TB = _round_up(B, 16)                 # 16: bf16 sublane packing, f32-safe too
        if gen >= 7 and B >= 32:
            # Two TensorCores per chip: give each one at least one batch tile.
            TB = min(TB, _round_up((B + 1) // 2, 16))
    else:
        TB = (cap // 128) * 128 if cap >= 128 else _round_up(cap, 16)
    Bp = _round_up(B, TB)
    nb = Bp // TB

    # ---- prepare activations: bf16, ones column for b1, batch padding ------
    ones = jnp.ones((B, 1), dtype=code.dtype)
    code1 = jnp.concatenate([code, ones], axis=1).astype(jnp.bfloat16)
    ref_b = reference_features.astype(jnp.bfloat16)
    if Bp != B:
        pad = Bp - B
        ref_b = jnp.pad(ref_b, ((0, pad), (0, 0)))
        code1 = jnp.pad(code1, ((0, pad), (0, 0)))

    # ---- VMEM budget (double-buffered streams + real in-kernel temporaries) -
    out_isize = jnp.dtype(out_dtype).itemsize
    stream_bytes = 2 * ((F + Z1) * TH * 2 + TH * Fp * 2)            # bf16 weight blocks, 2 bufs
    act_bytes = 2 * (TB * (F + Z1) * 2 + TB * Fp * out_isize) + 2 * Fp * 4
    scratch_bytes = TB * Fp * 4                                     # f32 accumulator
    tmp_bytes = TB * TH * (4 + 2) + TB * Fp * 4                     # h f32 + h bf16 + dot result
    needed = stream_bytes + act_bytes + scratch_bytes + tmp_bytes
    if gen >= 7:
        cap_bytes = 48 << 20      # v7x: 64 MiB physical per TC
    elif gen >= 4:
        cap_bytes = 96 << 20      # v4/v5e/v6e: 128 MiB physical
    else:
        cap_bytes = 12 << 20
    vmem_limit = int(min(cap_bytes, max(32 << 20, 2 * needed)))

    kernel = functools.partial(_decoder_fwd_kernel, bf16_tanh=bf16_tanh)

    out = pl.pallas_call(
        kernel,
        out_shape=jax.ShapeDtypeStruct((Bp, Fp), out_dtype),
        grid=(nb, nk),
        in_specs=[
            pl.BlockSpec((TB, F), lambda i, k: (i, 0)),     # activations: tiled over batch,
            pl.BlockSpec((TB, Z1), lambda i, k: (i, 0)),    #   constant over k (fetched once per i)
            pl.BlockSpec((F, TH), lambda i, k: (0, k)),     # weights: streamed over hidden blocks
            pl.BlockSpec((Z1, TH), lambda i, k: (0, k)),
            pl.BlockSpec((TH, Fp), lambda i, k: (k, 0)),
            pl.BlockSpec((1, Fp), lambda i, k: (0, 0)),     # b2: tiny, constant
        ],
        out_specs=pl.BlockSpec((TB, Fp), lambda i, k: (i, 0)),
        scratch_shapes=[pltpu.VMEM((TB, Fp), jnp.float32)],
        compiler_params=pltpu.CompilerParams(
            dimension_semantics=("parallel", "arbitrary"),
            vmem_limit_bytes=vmem_limit,
        ),
    )(ref_b, code1, w1f, w1z, w2, b2)

    # Strip batch / lane padding (stores were lane-dense; slicing happens outside).
    return out[:B, :F]


def init_decoder_params(key, feature_dim, z_dim, hidden, weight_dtype=jnp.bfloat16):
    """nn.Linear-style init; weights pre-transposed, lane-padded, bf16, b1 folded."""
    k1, k2, k3, k4 = jax.random.split(key, 4)
    in_dim = feature_dim + z_dim
    Hp = _round_up(hidden, 128)        # lane-dense hidden width
    Fp = _round_up(feature_dim, 128)   # lane-dense output width
    lim1 = 1.0 / jnp.sqrt(in_dim)
    lim2 = 1.0 / jnp.sqrt(hidden)
    # Pre-transposed: (in_features, out_features).
    w1 = jax.random.uniform(k1, (in_dim, hidden), jnp.float32, -lim1, lim1)
    b1 = jax.random.uniform(k2, (1, hidden), jnp.float32, -lim1, lim1)
    w2 = jax.random.uniform(k3, (hidden, feature_dim), jnp.float32, -lim2, lim2)
    b2 = jax.random.uniform(k4, (1, feature_dim), jnp.float32, -lim2, lim2)
    # Zero-pad to lane-dense shapes: padded hidden units see tanh(0)=0 against
    # zero W2 rows (contribute nothing); padded output columns are sliced off.
    w1 = jnp.pad(w1, ((0, 0), (0, Hp - hidden)))
    b1 = jnp.pad(b1, ((0, 0), (0, Hp - hidden)))
    w2 = jnp.pad(w2, ((0, Hp - hidden), (0, Fp - feature_dim)))
    b2 = jnp.pad(b2, ((0, 0), (0, Fp - feature_dim)))
    # Fold b1 into the code-side weight: the wrapper appends a ones column to
    # `code`, so b1 rides the same MXU contraction (no broadcast add on VPU).
    w1z = jnp.concatenate([w1[feature_dim:], b1], axis=0)
    return {
        "w1f": w1[:feature_dim].astype(weight_dtype),   # (F, Hp)   rows for reference_features
        "w1z": w1z.astype(weight_dtype),                # (Z+1, Hp) rows for code; last row = b1
        "w2": w2.astype(weight_dtype),                  # (Hp, Fp)
        "b2": b2,                                       # (1, Fp) f32
    }


if __name__ == "__main__":
    # Small-but-lane-aligned version of the module's defaults
    # (feature_dim=256, z_dim=16; decoder_size=[8192] shrunk to hidden=512).
    B, feature_dim, z_dim, hidden = 64, 256, 16, 512

    key = jax.random.PRNGKey(0)
    k_feat, k_code, k_par = jax.random.split(key, 3)
    reference_features = jax.random.normal(k_feat, (B, feature_dim), jnp.float32)
    code = jax.random.normal(k_code, (B, z_dim), jnp.float32)
    params = init_decoder_params(k_par, feature_dim, z_dim, hidden)

    # block_h=256 so the hidden-streaming "arbitrary" grid axis is exercised (nk=2).
    out = decoder_forward(reference_features, code, params, block_h=256)
    out = jax.block_until_ready(out)

    # Pure-JAX reference of the same math (bf16-stored weights / bf16-cast
    # activations upcast to f32; zero padding contributes nothing). Tolerance
    # covers the bf16 MXU operands and the bf16 tanh used on v6e/v7x.
    w1f = params["w1f"].astype(jnp.float32)
    w1z = params["w1z"][:-1].astype(jnp.float32)
    b1 = params["w1z"][-1:].astype(jnp.float32)
    w2 = params["w2"].astype(jnp.float32)
    x = jnp.concatenate([reference_features, code], axis=1)
    x = x.astype(jnp.bfloat16).astype(jnp.float32)
    w1 = jnp.concatenate([w1f, w1z], axis=0)
    ref = (jnp.tanh(x @ w1 + b1) @ w2 + params["b2"])[:, :feature_dim]

    assert out.shape == (B, feature_dim)
    max_err = float(jnp.max(jnp.abs(out - ref)))
    assert jnp.allclose(out, ref, atol=3e-2, rtol=3e-2), max_err

    print("KERNEL_OK")
</pallas_src>

<mosaic_0001>
module attributes {stable_mosaic.version = 11 : i64} {
  func.func @_decoder_fwd_kernel(%arg0: i32, %arg1: i32, %arg2: memref<32x256xbf16, #tpu.memory_space<vmem>>, %arg3: memref<32x17xbf16, #tpu.memory_space<vmem>>, %arg4: memref<256x256xbf16, #tpu.memory_space<vmem>>, %arg5: memref<17x256xbf16, #tpu.memory_space<vmem>>, %arg6: memref<256x256xbf16, #tpu.memory_space<vmem>>, %arg7: memref<1x256xf32, #tpu.memory_space<vmem>>, %arg8: memref<32x256xf32, #tpu.memory_space<vmem>>, %arg9: memref<32x256xf32, #tpu.memory_space<vmem>>) attributes {dimension_semantics = [#tpu.dimension_semantics<parallel>, #tpu.dimension_semantics<arbitrary>], iteration_bounds = array<i64: 2, 2>, scalar_prefetch = 0 : i64, scratch_operands = 1 : i64, tpu.core_type = #tpu.core_type<tc>, window_params = [{transform_indices = @transform_0, window_bounds = array<i64: 32, 256>}, {transform_indices = @transform_1, window_bounds = array<i64: 32, 17>}, {transform_indices = @transform_2, window_bounds = array<i64: 256, 256>}, {transform_indices = @transform_3, window_bounds = array<i64: 17, 256>}, {transform_indices = @transform_4, window_bounds = array<i64: 256, 256>}, {pipeline_mode = #tpu.pipeline_mode<synchronous>, transform_indices = @transform_5, window_bounds = array<i64: 1, 256>}, {transform_indices = @transform_6, window_bounds = array<i64: 32, 256>}]} {
    %c0_i32 = arith.constant 0 : i32
    %0 = arith.cmpi eq, %arg1, %c0_i32 : i32
    %1 = arith.extui %0 : i1 to i32
    %c0_i32_0 = arith.constant 0 : i32
    %2 = arith.cmpi ne, %1, %c0_i32_0 : i32
    scf.if %2 {
      %cst_17 = arith.constant 0.000000e+00 : f32
      %20 = vector.broadcast %cst_17 : f32 to vector<32x256xf32>
      %c0_18 = arith.constant 0 : index
      %c0_19 = arith.constant 0 : index
      %21 = vector.load %arg9[%c0_18, %c0_19] : memref<32x256xf32, #tpu.memory_space<vmem>>, vector<32x256xf32>
      tpu.vector_store %arg9[%c0_18, %c0_19], %20 {strides = array<i32>} : memref<32x256xf32, #tpu.memory_space<vmem>>, vector<32x256xf32>,
    } else {
    }
    %c0 = arith.constant 0 : index
    %c0_1 = arith.constant 0 : index
    %3 = vector.load %arg2[%c0, %c0_1] : memref<32x256xbf16, #tpu.memory_space<vmem>>, vector<32x256xbf16>
    %c0_2 = arith.constant 0 : index
    %c0_3 = arith.constant 0 : index
    %4 = vector.load %arg4[%c0_2, %c0_3] : memref<256x256xbf16, #tpu.memory_space<vmem>>, vector<256x256xbf16>
    %cst = arith.constant dense<0.000000e+00> : vector<32x256xf32>
    %5 = tpu.matmul %3, %4, %cst {dimension_numbers = #tpu.dot_dimension_numbers<[1], [0], [0], [1], [0, 0, 1, 1], [], []>} : vector<32x256xbf16>, vector<256x256xbf16>, vector<32x256xf32> -> vector<32x256xf32>
    %c0_4 = arith.constant 0 : index
    %c0_5 = arith.constant 0 : index
    %6 = vector.load %arg3[%c0_4, %c0_5] : memref<32x17xbf16, #tpu.memory_space<vmem>>, vector<32x17xbf16>
    %c0_6 = arith.constant 0 : index
    %c0_7 = arith.constant 0 : index
    %7 = vector.load %arg5[%c0_6, %c0_7] : memref<17x256xbf16, #tpu.memory_space<vmem>>, vector<17x256xbf16>
    %cst_8 = arith.constant dense<0.000000e+00> : vector<32x256xf32>
    %8 = tpu.matmul %6, %7, %cst_8 {dimension_numbers = #tpu.dot_dimension_numbers<[1], [0], [0], [1], [0, 0, 1, 1], [], []>} : vector<32x17xbf16>, vector<17x256xbf16>, vector<32x256xf32> -> vector<32x256xf32>
    %9 = arith.addf %5, %8 : vector<32x256xf32>
    %10 = arith.truncf %9 : vector<32x256xf32> to vector<32x256xbf16>
    %11 = math.tanh %10 : vector<32x256xbf16>
    %c0_9 = arith.constant 0 : index
    %c0_10 = arith.constant 0 : index
    %12 = vector.load %arg9[%c0_9, %c0_10] : memref<32x256xf32, #tpu.memory_space<vmem>>, vector<32x256xf32>
    %c0_11 = arith.constant 0 : index
    %c0_12 = arith.constant 0 : index
    %13 = vector.load %arg6[%c0_11, %c0_12] : memref<256x256xbf16, #tpu.memory_space<vmem>>, vector<256x256xbf16>
    %cst_13 = arith.constant dense<0.000000e+00> : vector<32x256xf32>
    %14 = tpu.matmul %11, %13, %cst_13 {dimension_numbers = #tpu.dot_dimension_numbers<[1], [0], [0], [1], [0, 0, 1, 1], [], []>} : vector<32x256xbf16>, vector<256x256xbf16>, vector<32x256xf32> -> vector<32x256xf32>
    %15 = arith.addf %12, %14 : vector<32x256xf32>
    %c0_14 = arith.constant 0 : index
    %c0_15 = arith.constant 0 : index
    %16 = vector.load %arg9[%c0_14, %c0_15] : memref<32x256xf32, #tpu.memory_space<vmem>>, vector<32x256xf32>
    tpu.vector_store %arg9[%c0_14, %c0_15], %15 {strides = array<i32>} : memref<32x256xf32, #tpu.memory_space<vmem>>, vector<32x256xf32>,
    %c1_i32 = arith.constant 1 : i32
    %17 = arith.cmpi eq, %arg1, %c1_i32 : i32
    %18 = arith.extui %17 : i1 to i32
    %c0_i32_16 = arith.constant 0 : i32
    %19 = arith.cmpi ne, %18, %c0_i32_16 : i32
    scf.if %19 {
      %c0_17 = arith.constant 0 : index
      %c0_18 = arith.constant 0 : index
      %20 = vector.load %arg9[%c0_17, %c0_18] : memref<32x256xf32, #tpu.memory_space<vmem>>, vector<32x256xf32>
      %c0_19 = arith.constant 0 : index
      %c0_20 = arith.constant 0 : index
      %21 = vector.load %arg7[%c0_19, %c0_20] : memref<1x256xf32, #tpu.memory_space<vmem>>, vector<1x256xf32>
      %22 = vector.broadcast %21 : vector<1x256xf32> to vector<32x256xf32>
      %23 = arith.addf %20, %22 : vector<32x256xf32>
      %c0_21 = arith.constant 0 : index
      %c0_22 = arith.constant 0 : index
      %24 = vector.load %arg8[%c0_21, %c0_22] : memref<32x256xf32, #tpu.memory_space<vmem>>, vector<32x256xf32>
      tpu.vector_store %arg8[%c0_21, %c0_22], %23 {strides = array<i32>} : memref<32x256xf32, #tpu.memory_space<vmem>>, vector<32x256xf32>,
    } else {
    }
    return
  }
  func.func @transform_0(%arg0: i32, %arg1: i32) -> (i32, i32) {
    %c0_i32 = arith.constant 0 : i32
    %c0_i32_0 = arith.constant 0 : i32
    return %arg0, %c0_i32 : i32, i32
  }
  func.func @transform_1(%arg0: i32, %arg1: i32) -> (i32, i32) {
    %c0_i32 = arith.constant 0 : i32
    %c0_i32_0 = arith.constant 0 : i32
    return %arg0, %c0_i32 : i32, i32
  }
  func.func @transform_2(%arg0: i32, %arg1: i32) -> (i32, i32) {
    %c0_i32 = arith.constant 0 : i32
    %c0_i32_0 = arith.constant 0 : i32
    return %c0_i32, %arg1 : i32, i32
  }
  func.func @transform_3(%arg0: i32, %arg1: i32) -> (i32, i32) {
    %c0_i32 = arith.constant 0 : i32
    %c0_i32_0 = arith.constant 0 : i32
    return %c0_i32, %arg1 : i32, i32
  }
  func.func @transform_4(%arg0: i32, %arg1: i32) -> (i32, i32) {
    %c0_i32 = arith.constant 0 : i32
    %c0_i32_0 = arith.constant 0 : i32
    return %arg1, %c0_i32 : i32, i32
  }
  func.func @transform_5(%arg0: i32, %arg1: i32) -> (i32, i32) {
    %c0_i32 = arith.constant 0 : i32
    %c0_i32_0 = arith.constant 0 : i32
    %c0_i32_1 = arith.constant 0 : i32
    return %c0_i32, %c0_i32_0 : i32, i32
  }
  func.func @transform_6(%arg0: i32, %arg1: i32) -> (i32, i32) {
    %c0_i32 = arith.constant 0 : i32
    %c0_i32_0 = arith.constant 0 : i32
    return %arg0, %c0_i32 : i32, i32
  }
}

</mosaic_0001>

<llo_original>
// kernel: tpu_custom_call.1
$region0: #{tpu_custom_call.1}
  #allocation0 [shape = 'u32[]', space=smem, size = 0x4, offset = 0x4, fixed_abs, tag = 'smem constant byte address 0x4 - core index']
  #allocation1 [shape = 'u32[144,128]{1,0:T(1,128)}', space=vmem, size = 0x12000, scoped, tag = 'internal scratch']
  #allocation2 [shape = 'f32[32,256]{1,0:T(8,128)}', space=vmem, size = 0x8000, scoped, tag = 'scratch operand']
  %s0 = inlined_call_operand.hbm [shape: bf16[64,256], index: 0, kind: input, shape index: {}]
  %s1 = inlined_call_operand.vmem [shape: bf16[64,17], index: 1, kind: input, shape index: {}]
  %s2 = inlined_call_operand.hbm [shape: bf16[256,512], index: 2, kind: input, shape index: {}]
  %s3 = inlined_call_operand.vmem [shape: bf16[17,512], index: 3, kind: input, shape index: {}]
  %s4 = inlined_call_operand.hbm [shape: bf16[512,256], index: 4, kind: input, shape index: {}]
  %s5 = inlined_call_operand.vmem [shape: f32[1,256], index: 5, kind: input, shape index: {}]
  %s6 = inlined_call_operand.hbm [shape: f32[64,256], index: 6, kind: output, shape index: {}]
  %s7 = sld [smem:[#allocation0]]
  $region115: #{tpu_custom_call.1} parent=0
    _
  %s9 = ssub.s32 1, %s7
  %s10 = scalar_select 0, %s9, %s7
  $region1: #{tpu_custom_call.1} parent=0
    #allocation3 [shape = 'u8[32768]{0}', space=vmem, size = 0x8000, scoped, tag = 'input window, operand 0']
    #allocation4 [shape = 's32[2]{0}', space=sflag, size = 0x8, scoped, tag = 'scoped memory for tpu_custom_call.1']
    #allocation5 [shape = 's32[2]{0}', space=sflag, size = 0x8, scoped, tag = 'scoped memory for tpu_custom_call.1']
    #allocation6 [shape = 'u8[262144]{0}', space=vmem, size = 0x40000, scoped, tag = 'input window, operand 2']
    #allocation7 [shape = 's32[2]{0}', space=sflag, size = 0x8, scoped, tag = 'scoped memory for tpu_custom_call.1']
    #allocation8 [shape = 'u8[24576]{0}', space=vmem, size = 0x6000, scoped, tag = 'input window, operand 3']
    #allocation9 [shape = 'u8[262144]{0}', space=vmem, size = 0x40000, scoped, tag = 'input window, operand 4']
    #allocation10 [shape = 'u8[65536]{0}', space=vmem, size = 0x10000, scoped, tag = 'output window, operand 0']
    %11 = vsyncpa [#allocation4], 0
    %s12 = scalar_lea.sflag [#allocation4], 1
    %13 = vsyncpa %s12, 0
    %14 = vsyncpa [#allocation7], 0
    %s15 = scalar_lea.sflag [#allocation7], 1
    %16 = vsyncpa %s15, 0
    %17 = vsyncpa [#allocation5], 0
    %s18 = scalar_lea.sflag [#allocation5], 1
    %19 = vsyncpa %s18, 0
    loop: start=0, step=1, limit=6
    $region2: #{tpu_custom_call.1} parent=1 // loop_pre_header
      _
    $region3: #{tpu_custom_call.1} parent=1 // loop_header
      %s21 = sphi 0, %s25
      %p22 = scmp.ge.s32.totalorder %s21, 6
      %s28 = sphi 0, %s40
      %s29 = sphi 0, %s36
      %s30 = sphi 0, %s28
      %s31 = sphi 0, %s29
      %s32 = sphi 0, %s30
      %s33 = sphi 0, %s31
      %s43 = sphi 0, %s45
      %s46 = sphi 0, %s43
      %s47 = sphi 0, %s46
      %s63 = sphi 0, %s47
      %s69 = sphi 0, %s71
      %s72 = sphi 0, %s69
      %s73 = sphi 0, %s72
      %s89 = sphi 0, %s73
      %s95 = sphi 0, %s97
      %s98 = sphi 0, %s95
      %s99 = sphi 0, %s98
      %s115 = sphi 0, %s99
      %s121 = sphi 0, %s123
      %s124 = sphi 0, %s121
      %s125 = sphi 0, %s124
      %s141 = sphi 0, %s125
      %s147 = sphi 0, %s149
      %s150 = sphi 0, %s147
      %s151 = sphi 0, %s150
      %s167 = sphi 0, %s151
      %s171 = sphi 0, %s171
      %s173 = sphi 0, %s171
      %s174 = sphi 0, %s173
      %s188 = sphi 0, %s174
      %s194 = sphi 0, %s196
      %s197 = sphi 0, %s194
      %s198 = sphi 0, %s197
      %s214 = sphi 0, %s198
    $region4: #{tpu_custom_call.1} parent=1 // loop_header_branch
      %24 = sbr.rel (%p22) target = $region8
    $region5: #{tpu_custom_call.1} parent=1 // loop_body
      %s26 = ssub.s32 %s21, 1
      %s27 = ssub.s32 %s21, 2
      %s34 = sadd.s32 1, %s29
      %p35 = scmp.ge.s32.totalorder %s34, 2
      %s36 = scalar_select %p35, 0, %s34
      %s37 = sadd.s32 1, %s28
      %s38 = scalar_select %p35, %s37, %s28
      %p39 = scmp.ge.s32.totalorder %s38, 2
      %s40 = scalar_select %p39, 0, %s38
      %s41 = ssub.s32 %s28, %s40
      %p42 = scmp.eq.s32.totalorder %s41, 0
      %s44 = sadd.s32 %s43, 1
      %s45 = scalar_select %p42, %s43, %s44
      %p48 = pneg %p42
      %p49 = scmp.eq.s32.totalorder %s21, 3
      %p50 = por %p48, %p49
      %p51 = scmp.ne.s32.totalorder %s43, %s46
      %p52 = scmp.eq.s32.totalorder %s21, 0
      %p53 = por %p51, %p52
      %p54 = scmp.ne.s32.totalorder %s43, %s46
      %p55 = scmp.eq.s32.totalorder %s26, 3
      %p56 = por %p54, %p55
      %p57 = scmp.ne.s32.totalorder %s46, %s47
      %p58 = scmp.eq.s32.totalorder %s26, 0
      %p59 = por %p57, %p58
      %p60 = scmp.ne.s32.totalorder %s46, %s47
      %p61 = scmp.eq.s32.totalorder %s27, 3
      %p62 = por %p60, %p61
      %p64 = scmp.ne.s32.totalorder %s47, %s63
      %p65 = scmp.eq.s32.totalorder %s27, 0
      %p66 = por %p64, %p65
      %s67 = ssub.s32 %s28, %s40
      %p68 = scmp.eq.s32.totalorder %s67, 0
      %s70 = sadd.s32 %s69, 1
      %s71 = scalar_select %p68, %s69, %s70
      %p74 = pneg %p68
      %p75 = scmp.eq.s32.totalorder %s21, 3
      %p76 = por %p74, %p75
      %p77 = scmp.ne.s32.totalorder %s69, %s72
      %p78 = scmp.eq.s32.totalorder %s21, 0
      %p79 = por %p77, %p78
      %p80 = scmp.ne.s32.totalorder %s69, %s72
      %p81 = scmp.eq.s32.totalorder %s26, 3
      %p82 = por %p80, %p81
      %p83 = scmp.ne.s32.totalorder %s72, %s73
      %p84 = scmp.eq.s32.totalorder %s26, 0
      %p85 = por %p83, %p84
      %p86 = scmp.ne.s32.totalorder %s72, %s73
      %p87 = scmp.eq.s32.totalorder %s27, 3
      %p88 = por %p86, %p87
      %p90 = scmp.ne.s32.totalorder %s73, %s89
      %p91 = scmp.eq.s32.totalorder %s27, 0
      %p92 = por %p90, %p91
      %s93 = ssub.s32 %s29, %s36
      %p94 = scmp.eq.s32.totalorder %s93, 0
      %s96 = sadd.s32 %s95, 1
      %s97 = scalar_select %p94, %s95, %s96
      %p100 = pneg %p94
      %p101 = scmp.eq.s32.totalorder %s21, 3
      %p102 = por %p100, %p101
      %p103 = scmp.ne.s32.totalorder %s95, %s98
      %p104 = scmp.eq.s32.totalorder %s21, 0
      %p105 = por %p103, %p104
      %p106 = scmp.ne.s32.totalorder %s95, %s98
      %p107 = scmp.eq.s32.totalorder %s26, 3
      %p108 = por %p106, %p107
      %p109 = scmp.ne.s32.totalorder %s98, %s99
      %p110 = scmp.eq.s32.totalorder %s26, 0
      %p111 = por %p109, %p110
      %p112 = scmp.ne.s32.totalorder %s98, %s99
      %p113 = scmp.eq.s32.totalorder %s27, 3
      %p114 = por %p112, %p113
      %p116 = scmp.ne.s32.totalorder %s99, %s115
      %p117 = scmp.eq.s32.totalorder %s27, 0
      %p118 = por %p116, %p117
      %s119 = ssub.s32 %s29, %s36
      %p120 = scmp.eq.s32.totalorder %s119, 0
      %s122 = sadd.s32 %s121, 1
      %s123 = scalar_select %p120, %s121, %s122
      %p126 = pneg %p120
      %p127 = scmp.eq.s32.totalorder %s21, 3
      %p128 = por %p126, %p127
      %p129 = scmp.ne.s32.totalorder %s121, %s124
      %p130 = scmp.eq.s32.totalorder %s21, 0
      %p131 = por %p129, %p130
      %p132 = scmp.ne.s32.totalorder %s121, %s124
      %p133 = scmp.eq.s32.totalorder %s26, 3
      %p134 = por %p132, %p133
      %p135 = scmp.ne.s32.totalorder %s124, %s125
      %p136 = scmp.eq.s32.totalorder %s26, 0
      %p137 = por %p135, %p136
      %p138 = scmp.ne.s32.totalorder %s124, %s125
      %p139 = scmp.eq.s32.totalorder %s27, 3
      %p140 = por %p138, %p139
      %p142 = scmp.ne.s32.totalorder %s125, %s141
      %p143 = scmp.eq.s32.totalorder %s27, 0
      %p144 = por %p142, %p143
      %s145 = ssub.s32 %s29, %s36
      %p146 = scmp.eq.s32.totalorder %s145, 0
      %s148 = sadd.s32 %s147, 1
      %s149 = scalar_select %p146, %s147, %s148
      %p152 = pneg %p146
      %p153 = scmp.eq.s32.totalorder %s21, 3
      %p154 = por %p152, %p153
      %p155 = scmp.ne.s32.totalorder %s147, %s150
      %p156 = scmp.eq.s32.totalorder %s21, 0
      %p157 = por %p155, %p156
      %p158 = scmp.ne.s32.totalorder %s147, %s150
      %p159 = scmp.eq.s32.totalorder %s26, 3
      %p160 = por %p158, %p159
      %p161 = scmp.ne.s32.totalorder %s150, %s151
      %p162 = scmp.eq.s32.totalorder %s26, 0
      %p163 = por %p161, %p162
      %p164 = scmp.ne.s32.totalorder %s150, %s151
      %p165 = scmp.eq.s32.totalorder %s27, 3
      %p166 = por %p164, %p165
      %p168 = scmp.ne.s32.totalorder %s151, %s167
      %p169 = scmp.eq.s32.totalorder %s27, 0
      %p170 = por %p168, %p169
      %s172 = sadd.s32 %s171, 1
      %p175 = scmp.eq.s32.totalorder %s21, 3
      %p176 = scmp.ne.s32.totalorder %s171, %s173
      %p177 = scmp.eq.s32.totalorder %s21, 0
      %p178 = por %p176, %p177
      %p179 = scmp.ne.s32.totalorder %s171, %s173
      %p180 = scmp.eq.s32.totalorder %s26, 3
      %p181 = por %p179, %p180
      %p182 = scmp.ne.s32.totalorder %s173, %s174
      %p183 = scmp.eq.s32.totalorder %s26, 0
      %p184 = por %p182, %p183
      %p185 = scmp.ne.s32.totalorder %s173, %s174
      %p186 = scmp.eq.s32.totalorder %s27, 3
      %p187 = por %p185, %p186
      %p189 = scmp.ne.s32.totalorder %s174, %s188
      %p190 = scmp.eq.s32.totalorder %s27, 0
      %p191 = por %p189, %p190
      %s192 = ssub.s32 %s28, %s40
      %p193 = scmp.eq.s32.totalorder %s192, 0
      %s195 = sadd.s32 %s194, 1
      %s196 = scalar_select %p193, %s194, %s195
      %p199 = pneg %p193
      %p200 = scmp.eq.s32.totalorder %s21, 3
      %p201 = por %p199, %p200
      %p202 = scmp.ne.s32.totalorder %s194, %s197
      %p203 = scmp.eq.s32.totalorder %s21, 0
      %p204 = por %p202, %p203
      %p205 = scmp.ne.s32.totalorder %s194, %s197
      %p206 = scmp.eq.s32.totalorder %s26, 3
      %p207 = por %p205, %p206
      %p208 = scmp.ne.s32.totalorder %s197, %s198
      %p209 = scmp.eq.s32.totalorder %s26, 0
      %p210 = por %p208, %p209
      %p211 = scmp.ne.s32.totalorder %s197, %s198
      %p212 = scmp.eq.s32.totalorder %s27, 3
      %p213 = por %p211, %p212
      %p215 = scmp.ne.s32.totalorder %s198, %s214
      %p216 = scmp.eq.s32.totalorder %s27, 0
      %p217 = por %p215, %p216
      %p218 = scmp.le.s32.totalorder 1, %s21
      %p219 = scmp.lt.s32.totalorder %s21, 5
      %p220 = pnand %p218, %p219
      %p221 = pneg %p220
      // Predicated region
      $region9: #{tpu_custom_call.1} parent=5 // pred_check
        _
      $region10: #{tpu_custom_call.1} parent=5 // pred_check_branch
        %223 = sbr.rel (%p220) target = $region12
      $region11: #{tpu_custom_call.1} parent=5 // pred_region
        %s224 = ssub.s32 %s21, 1
        // Predicated region
        $region13: #{tpu_custom_call.1} parent=11 // pred_check
          %p225 = pneg %p184
        $region14: #{tpu_custom_call.1} parent=11 // pred_check_branch
          %227 = sbr.rel (%p225) target = $region16
        $region15: #{tpu_custom_call.1} parent=11 // pred_region
          _
        $region16: #{tpu_custom_call.1} parent=11 // pred_fallthru
          _
      $region12: #{tpu_custom_call.1} parent=5 // pred_fallthru
        _
      %p228 = scmp.lt.s32.totalorder %s21, 4
      // Predicated region
      $region17: #{tpu_custom_call.1} parent=5 // pred_check
        %p229 = pneg %p228
      $region18: #{tpu_custom_call.1} parent=5 // pred_check_branch
        %231 = sbr.rel (%p229) target = $region20
      $region19: #{tpu_custom_call.1} parent=5 // pred_region
        // Predicated region
        $region21: #{tpu_custom_call.1} parent=19 // pred_check
          %p232 = pneg %p53
        $region22: #{tpu_custom_call.1} parent=19 // pred_check_branch
          %234 = sbr.rel (%p232) target = $region24
        $region23: #{tpu_custom_call.1} parent=19 // pred_region
          %s235 = sand.u32 %s43, 1
          %s236 = scalar_lea.sflag [#allocation4], %s235
          %s237 = sand.u32 %s43, 1
          %s238 = smul.addr %s237, 32
          %s239 = scalar_lea.vmem [#allocation3], %s238
          %s240 = smul.u32 4, %s28
          %s242 = ssub.s32 512, 512
          %243 = vsyncadd %s236, %s242
          %s244 = smul.addr %s240, 2
          %s245 = smul.addr %s244, 64
          %s246 = scalar_lea.hbm %s0, %s245
          %s247 = sshll.u32 %s239, 4
          %s248 = int_to_ptr.vmem [resolvable:$true] %s247
          %253 = dma.hbm_to_vmem [thread:$0]  %s246, 512, %s248, %s236, 128, 128, 8
        $region24: #{tpu_custom_call.1} parent=19 // pred_fallthru
          _
        // Predicated region
        $region25: #{tpu_custom_call.1} parent=19 // pred_check
          %p254 = pneg %p79
        $region26: #{tpu_custom_call.1} parent=19 // pred_check_branch
          %256 = sbr.rel (%p254) target = $region28
        $region27: #{tpu_custom_call.1} parent=19 // pred_region
          %s257 = smul.u32 4, %s28
          %p258 = scmp.lt.s32.totalorder %s257, 7
          %s259 = scalar_select %p258, %s257, 7
          %s260 = smul.addr %s259, 4
          %s261 = scalar_lea.vmem %s1, %s260
          %s262 = smul.u32 4, %s28
        $region28: #{tpu_custom_call.1} parent=19 // pred_fallthru
          _
        // Predicated region
        $region29: #{tpu_custom_call.1} parent=19 // pred_check
          %p263 = pneg %p105
        $region30: #{tpu_custom_call.1} parent=19 // pred_check_branch
          %265 = sbr.rel (%p263) target = $region32
        $region31: #{tpu_custom_call.1} parent=19 // pred_region
          %s266 = sand.u32 %s21, 1
          %s267 = scalar_lea.sflag [#allocation7], %s266
          %s268 = sand.u32 %s95, 1
          %s269 = smul.addr %s268, 256
          %s270 = scalar_lea.vmem [#allocation6], %s269
          %s271 = smul.u32 2, %s29
          %s273 = ssub.s32 4096, 4096
          %274 = vsyncadd %s267, %s273
          %s275 = smul.addr %s271, 64
          %s276 = scalar_lea.hbm %s2, %s275
          %s277 = sshll.u32 %s270, 4
          %s278 = int_to_ptr.vmem [resolvable:$true] %s277
          %283 = dma.hbm_to_vmem [thread:$0]  %s276, 4096, %s278, %s267, 256, 128, 8
        $region32: #{tpu_custom_call.1} parent=19 // pred_fallthru
          _
        // Predicated region
        $region33: #{tpu_custom_call.1} parent=19 // pred_check
          %p284 = pneg %p131
        $region34: #{tpu_custom_call.1} parent=19 // pred_check_branch
          %286 = sbr.rel (%p284) target = $region36
        $region35: #{tpu_custom_call.1} parent=19 // pred_region
          %s287 = sand.u32 %s121, 1
          %s288 = sand.u32 %s121, 1
          %s289 = smul.addr %s288, 24
          %s290 = scalar_lea.vmem [#allocation8], %s289
          %s291 = smul.u32 2, %s29
          %s292 = smul.addr %s291, 4
          %s293 = scalar_lea.vmem %s3, %s292
          // Predicated region
          $region37: #{tpu_custom_call.1} parent=35 // pred_check
            _
          $region38: #{tpu_custom_call.1} parent=35 // pred_check_branch
            %295 = sbr.rel (0) target = $region40
          $region39: #{tpu_custom_call.1} parent=35 // pred_region
            // Predicated region
            $region41: #{tpu_custom_call.1} parent=39 // pred_check
              _
            $region42: #{tpu_custom_call.1} parent=39 // pred_check_branch
              %297 = sbr.rel (0) target = $region44
            $region43: #{tpu_custom_call.1} parent=39 // pred_region
              // Predicated region
              $region56: #{tpu_custom_call.1} parent=43 // pred_check
                _
              $region57: #{tpu_custom_call.1} parent=43 // pred_check_branch
                %317 = sbr.rel (0) target = $region59
              $region58: #{tpu_custom_call.1} parent=43 // pred_region
                loop: start=0, step=1, limit=1
                $region60: #{tpu_custom_call.1} parent=58 // loop_pre_header
                  _
                $region61: #{tpu_custom_call.1} parent=58 // loop_header
                  %s319 = sphi 0, %s323
                  %p320 = scmp.ge.s32.totalorder %s319, 1
                  %s324 = sphi %s293, %s293
                  %s325 = sphi %s290, %s290
                $region62: #{tpu_custom_call.1} parent=58 // loop_header_branch
                  %322 = sbr.rel (%p320) target = $region66
                $region63: #{tpu_custom_call.1} parent=58 // loop_body
                  %v326 = vld [vmem:[%s324] sm:$0xff]
                  %327 = vst [vmem:[%s325] sm:$0xff] %v326
                  %v328 = vld [vmem:[%s324 + $0x10] sm:$0xff]
                  %329 = vst [vmem:[%s325 + $0x8] sm:$0xff] %v328
                  %v330 = vld [vmem:[%s324 + $0x20] sm:$0xff]
                  %331 = vst [vmem:[%s325 + $0x10] sm:$0xff] %v330
                $region64: #{tpu_custom_call.1} parent=58 // loop_footer
                  %s323 = sadd.s32 1, %s319
                $region65: #{tpu_custom_call.1} parent=58 // loop_footer_branch
                  %318 = sbr.rel target = $region61
                $region66: #{tpu_custom_call.1} parent=58 // loop_exit
                  _
              $region59: #{tpu_custom_call.1} parent=43 // pred_fallthru
                _
              // Predicated region
              $region67: #{tpu_custom_call.1} parent=43 // pred_check
                _
              $region68: #{tpu_custom_call.1} parent=43 // pred_check_branch
                %333 = sbr.rel target = $region70
              $region69: #{tpu_custom_call.1} parent=43 // pred_region
                _
              $region70: #{tpu_custom_call.1} parent=43 // pred_fallthru
                _
            $region44: #{tpu_custom_call.1} parent=39 // pred_fallthru
              _
            // Predicated region
            $region45: #{tpu_custom_call.1} parent=39 // pred_check
              _
            $region46: #{tpu_custom_call.1} parent=39 // pred_check_branch
              %299 = sbr.rel target = $region48
            $region47: #{tpu_custom_call.1} parent=39 // pred_region
              %s301 = ssub.s32 256, 1
              loop: start=0, step=1, limit=1
              $region49: #{tpu_custom_call.1} parent=47 // loop_pre_header
                _
              $region50: #{tpu_custom_call.1} parent=47 // loop_header
                %s303 = sphi 0, %s307
                %p304 = scmp.ge.s32.totalorder %s303, 1
                %s308 = sphi %s293, %s293
                %s309 = sphi %s290, %s290
              $region51: #{tpu_custom_call.1} parent=47 // loop_header_branch
                %306 = sbr.rel (%p304) target = $region55
              $region52: #{tpu_custom_call.1} parent=47 // loop_body
                %v310 = vld [vmem:[%s308] sm:%s301]
                %311 = vst [vmem:[%s309] sm:%s301] %v310
                %v312 = vld [vmem:[%s308 + $0x10] sm:%s301]
                %313 = vst [vmem:[%s309 + $0x8] sm:%s301] %v312
                %v314 = vld [vmem:[%s308 + $0x20] sm:%s301]
                %315 = vst [vmem:[%s309 + $0x10] sm:%s301] %v314
              $region53: #{tpu_custom_call.1} parent=47 // loop_footer
                %s307 = sadd.s32 1, %s303
              $region54: #{tpu_custom_call.1} parent=47 // loop_footer_branch
                %302 = sbr.rel target = $region50
              $region55: #{tpu_custom_call.1} parent=47 // loop_exit
                _
            $region48: #{tpu_custom_call.1} parent=39 // pred_fallthru
              _
          $region40: #{tpu_custom_call.1} parent=35 // pred_fallthru
            _
          %334 = vnop
        $region36: #{tpu_custom_call.1} parent=19 // pred_fallthru
          _
        // Predicated region
        $region71: #{tpu_custom_call.1} parent=19 // pred_check
          %p335 = pneg %p157
        $region72: #{tpu_custom_call.1} parent=19 // pred_check_branch
          %337 = sbr.rel (%p335) target = $region74
        $region73: #{tpu_custom_call.1} parent=19 // pred_region
          %s338 = sand.u32 %s21, 1
          %s339 = scalar_lea.sflag [#allocation7], %s338
          %s340 = sand.u32 %s147, 1
          %s341 = smul.addr %s340, 256
          %s342 = scalar_lea.vmem [#allocation9], %s341
          %s343 = smul.u32 32, %s29
          %s345 = ssub.s32 4096, 4096
          %346 = vsyncadd %s339, %s345
          %s347 = smul.addr %s343, 2
          %s348 = smul.addr %s347, 64
          %s349 = scalar_lea.hbm %s4, %s348
          %s350 = sshll.u32 %s342, 4
          %s351 = int_to_ptr.vmem [resolvable:$true] %s350
          %356 = dma.hbm_to_vmem [thread:$0]  %s349, 4096, %s351, %s339, 128, 128, 8
        $region74: #{tpu_custom_call.1} parent=19 // pred_fallthru
          _
      $region20: #{tpu_custom_call.1} parent=5 // pred_fallthru
        _
      %p357 = scmp.le.s32.totalorder 1, %s21
      %p358 = scmp.lt.s32.totalorder %s21, 5
      %p359 = pnand %p357, %p358
      %p360 = pneg %p359
      // Predicated region
      $region75: #{tpu_custom_call.1} parent=5 // pred_check
        _
      $region76: #{tpu_custom_call.1} parent=5 // pred_check_branch
        %362 = sbr.rel (%p359) target = $region78
      $region77: #{tpu_custom_call.1} parent=5 // pred_region
        %s363 = ssub.s32 %s21, 1
        %s364 = sand.u32 %s46, 1
        %s365 = scalar_lea.sflag [#allocation4], %s364
        %s366 = sand.u32 %s46, 1
        %s367 = smul.addr %s366, 32
        %s368 = scalar_lea.vmem [#allocation3], %s367
        // Predicated region
        $region79: #{tpu_custom_call.1} parent=77 // pred_check
          %p369 = pneg %p59
        $region80: #{tpu_custom_call.1} parent=77 // pred_check_branch
          %371 = sbr.rel (%p369) target = $region82
        $region81: #{tpu_custom_call.1} parent=77 // pred_region
          %372 = dma.done %s365, 512
        $region82: #{tpu_custom_call.1} parent=77 // pred_fallthru
          _
        %s373 = sand.u32 %s26, 1
        %s374 = scalar_lea.sflag [#allocation7], %s373
        %s375 = sand.u32 %s98, 1
        %s376 = smul.addr %s375, 256
        %s377 = scalar_lea.vmem [#allocation6], %s376
        // Predicated region
        $region83: #{tpu_custom_call.1} parent=77 // pred_check
          %p378 = pneg %p111
        $region84: #{tpu_custom_call.1} parent=77 // pred_check_branch
          %380 = sbr.rel (%p378) target = $region86
        $region85: #{tpu_custom_call.1} parent=77 // pred_region
          %381 = dma.done %s374, 4096
        $region86: #{tpu_custom_call.1} parent=77 // pred_fallthru
          _
        %s382 = sand.u32 %s124, 1
        %s383 = sand.u32 %s124, 1
        %s384 = smul.addr %s383, 24
        %s385 = scalar_lea.vmem [#allocation8], %s384
        // Predicated region
        $region87: #{tpu_custom_call.1} parent=77 // pred_check
          %p386 = pneg %p137
        $region88: #{tpu_custom_call.1} parent=77 // pred_check_branch
          %388 = sbr.rel (%p386) target = $region90
        $region89: #{tpu_custom_call.1} parent=77 // pred_region
          _
        $region90: #{tpu_custom_call.1} parent=77 // pred_fallthru
          _
        %s389 = sand.u32 %s26, 1
        %s390 = scalar_lea.sflag [#allocation7], %s389
        %s391 = sand.u32 %s150, 1
        %s392 = smul.addr %s391, 256
        %s393 = scalar_lea.vmem [#allocation9], %s392
        // Predicated region
        $region91: #{tpu_custom_call.1} parent=77 // pred_check
          %p394 = pneg %p163
        $region92: #{tpu_custom_call.1} parent=77 // pred_check_branch
          %396 = sbr.rel (%p394) target = $region94
        $region93: #{tpu_custom_call.1} parent=77 // pred_region
          %397 = dma.done %s390, 4096
        $region94: #{tpu_custom_call.1} parent=77 // pred_fallthru
          _
        %s398 = sand.u32 %s46, 1
        %s399 = scalar_lea.sflag [#allocation4], %s398
        %s400 = sand.u32 %s46, 1
        %s401 = smul.addr %s400, 32
        %s402 = scalar_lea.vmem [#allocation3], %s401
        %p403 = pneg %p59
        %p404 = pneg %p56
        %s405 = smul.u32 4, %s30
        %p406 = scmp.lt.s32.totalorder %s405, 7
        %s407 = scalar_select %p406, %s405, 7
        %s408 = smul.addr %s407, 4
        %s409 = scalar_lea.vmem %s1, %s408
        %p410 = pneg %p85
        %p411 = pneg %p82
        %s412 = sand.u32 %s26, 1
        %s413 = scalar_lea.sflag [#allocation7], %s412
        %s414 = sand.u32 %s98, 1
        %s415 = smul.addr %s414, 256
        %s416 = scalar_lea.vmem [#allocation6], %s415
        %p417 = pneg %p111
        %p418 = pneg %p108
        %s419 = sand.u32 %s124, 1
        %s420 = sand.u32 %s124, 1
        %s421 = smul.addr %s420, 24
        %s422 = scalar_lea.vmem [#allocation8], %s421
        %p423 = pneg %p137
        %p424 = pneg %p134
        %s425 = sand.u32 %s26, 1
        %s426 = scalar_lea.sflag [#allocation7], %s425
        %s427 = sand.u32 %s150, 1
        %s428 = smul.addr %s427, 256
        %s429 = scalar_lea.vmem [#allocation9], %s428
        %p430 = pneg %p163
        %p431 = pneg %p160
        %p432 = pneg %p184
        %p433 = pneg %p181
        %p434 = pneg %p210
        %p435 = pneg %p207
        %s436 = sand.u32 %s197, 1
        %s437 = scalar_lea.sflag [#allocation5], %s436
        %s438 = sand.u32 %s197, 1
        %s439 = smul.addr %s438, 64
        %s440 = scalar_lea.vmem [#allocation10], %s439
        %s441 = smul.u32 4, %s30
        %s442 = smul.u32 4, %s30
        %p443 = scmp.lt.s32.totalorder %s442, 7
        %s444 = scalar_select %p443, %s442, 7
        %s445 = smul.addr %s444, 4
        %s446 = scalar_lea.vmem %s1, %s445
        %s447 = smul.u32 4, %s30
        %s448 = smul.u32 2, %s31
        %s449 = smul.u32 2, %s31
        %s450 = smul.u32 32, %s31
        %s451 = smul.u32 4, %s30
        %p453 = scmp.eq.s32.totalorder %s31, 0
        // Predicated region
        $region95: #{tpu_custom_call.1} parent=77 // pred_check
          %p454 = pneg %p453
        $region96: #{tpu_custom_call.1} parent=77 // pred_check_branch
          %456 = sbr.rel (%p454) target = $region98
        $region97: #{tpu_custom_call.1} parent=77 // pred_region
          %457 = vst [vmem:[#allocation2] sm:$0xff] 0.0
          %458 = vst [vmem:[#allocation2 + $0x8] sm:$0xff] 0.0
          %459 = vst [vmem:[#allocation2 + $0x10] sm:$0xff] 0.0
          %460 = vst [vmem:[#allocation2 + $0x18] sm:$0xff] 0.0
          %461 = vst [vmem:[#allocation2 + $0x20] sm:$0xff] 0.0
          %462 = vst [vmem:[#allocation2 + $0x28] sm:$0xff] 0.0
          %463 = vst [vmem:[#allocation2 + $0x30] sm:$0xff] 0.0
          %464 = vst [vmem:[#allocation2 + $0x38] sm:$0xff] 0.0
        $region98: #{tpu_custom_call.1} parent=77 // pred_fallthru
          _
        %v465 = vld [vmem:[%s368] sm:$0xff]
        %v466 = vld [vmem:[%s368 + $0x8] sm:$0xff]
        %v467 = vld [vmem:[%s368 + $0x10] sm:$0xff]
        %v468 = vld [vmem:[%s368 + $0x18] sm:$0xff]
        %v469 = vld [vmem:[%s377] sm:$0xff]
        %v470 = vld [vmem:[%s377 + $0x8] sm:$0xff]
        %v471 = vld [vmem:[%s377 + $0x10] sm:$0xff]
        %v472 = vld [vmem:[%s377 + $0x18] sm:$0xff]
        %v473 = vld [vmem:[%s377 + $0x20] sm:$0xff]
        %v474 = vld [vmem:[%s377 + $0x28] sm:$0xff]
        %v475 = vld [vmem:[%s377 + $0x30] sm:$0xff]
        %v476 = vld [vmem:[%s377 + $0x38] sm:$0xff]
        %v477 = vld [vmem:[%s377 + $0x40] sm:$0xff]
        %v478 = vld [vmem:[%s377 + $0x48] sm:$0xff]
        %v479 = vld [vmem:[%s377 + $0x50] sm:$0xff]
        %v480 = vld [vmem:[%s377 + $0x58] sm:$0xff]
        %v481 = vld [vmem:[%s377 + $0x60] sm:$0xff]
        %v482 = vld [vmem:[%s377 + $0x68] sm:$0xff]
        %v483 = vld [vmem:[%s377 + $0x70] sm:$0xff]
        %v484 = vld [vmem:[%s377 + $0x78] sm:$0xff]
        %v485 = vld [vmem:[%s377 + $0x80] sm:$0xff]
        %v486 = vld [vmem:[%s377 + $0x88] sm:$0xff]
        %v487 = vld [vmem:[%s377 + $0x90] sm:$0xff]
        %v488 = vld [vmem:[%s377 + $0x98] sm:$0xff]
        %v489 = vld [vmem:[%s377 + $0xa0] sm:$0xff]
        %v490 = vld [vmem:[%s377 + $0xa8] sm:$0xff]
        %v491 = vld [vmem:[%s377 + $0xb0] sm:$0xff]
        %v492 = vld [vmem:[%s377 + $0xb8] sm:$0xff]
        %v493 = vld [vmem:[%s377 + $0xc0] sm:$0xff]
        %v494 = vld [vmem:[%s377 + $0xc8] sm:$0xff]
        %v495 = vld [vmem:[%s377 + $0xd0] sm:$0xff]
        %v496 = vld [vmem:[%s377 + $0xd8] sm:$0xff]
        %v497 = vld [vmem:[%s377 + $0xe0] sm:$0xff]
        %v498 = vld [vmem:[%s377 + $0xe8] sm:$0xff]
        %v499 = vld [vmem:[%s377 + $0xf0] sm:$0xff]
        %v500 = vld [vmem:[%s377 + $0xf8] sm:$0xff]
        %v501 = vld [vmem:[%s446] sm:$0xf]
        %v502 = vld [vmem:[%s446 + $0x4] sm:$0xf]
        %v503 = vld [vmem:[%s446 + $0x8] sm:$0xf]
        %v504 = vld [vmem:[%s446 + $0xc] sm:$0xf]
        %v505 = vld [vmem:[%s385] sm:$0xff]
        %v506 = vld [vmem:[%s385 + $0x8] sm:$0xff]
        %v507 = vld [vmem:[%s385 + $0x10] sm:$0x11]
        %v512 = vunpack.c.l.b16 %v501
        %v513 = vunpack.c.l.b16 %v502
        %v514 = vunpack.c.l.b16 %v503
        %v515 = vunpack.c.l.b16 %v504
        %v516 = vpack.c.b16 %v513, %v512
        %v517 = vpack.c.b16 %v515, %v514
        %v521 = vunpack.c.l.b16 %v505
        %v522 = vunpack.c.h.b16 %v505
        %v523 = vunpack.c.l.b16 %v506
        %v524 = vunpack.c.h.b16 %v506
        %v525 = vunpack.c.l.b16 %v507
        %v526 = vunpack.c.h.b16 %v507
        %v527 = vpack.c.b16 %v523, %v521
        %v528 = vpack.c.b16 %v524, %v522
        %v529 = vpack.c.b16 %v525, %v525
        %v530 = vpack.c.b16 %v526, %v526
        %vm533 = vcmask 138240
        %v535 = vsel %vm533, %v516, 0
        %v538 = vsel %vm533, %v517, 0
        %vm540 = vcmask 1040384
        %v541 = vsel 0, 4294967295, 65535
        %v542 = vsel %vm540, %v541, 0
        %v544 = vand.u32 %v529, %v542
        %v547 = vand.u32 %v530, %v542
        %549 = vmatprep.subr.bf16.mxu0 0
        %550 = vmatpush1.bf16.msra.mxu0 0
        %551 = vmatprep.subr.bf16.mxu0 0
        %552 = vmatpush1.bf16.msra.mxu0 0
        %553 = vmatprep.subr.bf16.mxu0 0
        %554 = vmatpush1.bf16.msra.mxu0 0
        %555 = vmatprep.subr.bf16.mxu0 0
        %556 = vmatpush1.bf16.msra.mxu0 0
        %557 = vmatprep.subr.bf16.mxu0 0
        %558 = vmatpush1.bf16.msra.mxu0 0
        %559 = vmatprep.subr.bf16.mxu0 0
        %560 = vmatpush1.bf16.msra.mxu0 0
        %561 = vmatprep.subr.bf16.mxu0 %v547
        %562 = vmatpush1.bf16.msra.mxu0 %v544
        %563 = vmatprep.subr.bf16.mxu0 %v528
        %564 = vmatpush1.bf16.msra.mxu0 %v527
        %565 = vmatprep.subr.bf16.mxu0 0
        %566 = vmatpush2.bf16.msra.mxu0 0
        %567 = vmatprep.subr.bf16.mxu0 0
        %568 = vmatpush2.bf16.msra.mxu0 0
        %569 = vmatprep.subr.bf16.mxu0 0
        %570 = vmatpush2.bf16.msra.mxu0 0
        %571 = vmatprep.subr.bf16.mxu0 0
        %572 = vmatpush2.bf16.msra.mxu0 0
        %573 = vmatprep.subr.bf16.mxu0 0
        %574 = vmatpush2.bf16.msra.mxu0 0
        %575 = vmatprep.subr.bf16.mxu0 0
        %576 = vmatpush2.bf16.msra.mxu0 0
        %577 = vmatprep.subr.bf16.mxu0 0
        %578 = vmatpush2.bf16.msra.mxu0 0
        %579 = vmatprep.subr.bf16.mxu0 0
        %580 = vmatpush2.bf16.msra.mxu0 0
        %581 = vmatprep.mubr.bf16.mxu0 0
        %582 = vmatmul.mubr.bf16.gmra.mxu0 %v535
        %v583 = vpop.f32.mrf.mxu0
        %v584 = vadd.f32 0.0, %v583
        %v585 = vpop.f32.mrf.mxu0
        %v586 = vadd.f32 0.0, %v585
        %v587 = vpop.f32.mrf.mxu0
        %v588 = vadd.f32 0.0, %v587
        %v589 = vpop.f32.mrf.mxu0
        %v590 = vadd.f32 0.0, %v589
        %591 = vmatprep.mubr.bf16.mxu0 0
        %592 = vmatmul.mubr.bf16.gmra.mxu0 %v538
        %v593 = vpop.f32.mrf.mxu0
        %v594 = vadd.f32 0.0, %v593
        %v595 = vpop.f32.mrf.mxu0
        %v596 = vadd.f32 0.0, %v595
        %v597 = vpop.f32.mrf.mxu0
        %v598 = vadd.f32 0.0, %v597
        %v599 = vpop.f32.mrf.mxu0
        %v600 = vadd.f32 0.0, %v599
        %601 = vdwg.mxu0
        %v606 = vunpack.c.l.b16 %v465
        %v607 = vunpack.c.h.b16 %v465
        %v608 = vunpack.c.l.b16 %v466
        %v609 = vunpack.c.h.b16 %v466
        %v610 = vunpack.c.l.b16 %v467
        %v611 = vunpack.c.h.b16 %v467
        %v612 = vunpack.c.l.b16 %v468
        %v613 = vunpack.c.h.b16 %v468
        %v614 = vpack.c.b16 %v608, %v606
        %v615 = vpack.c.b16 %v609, %v607
        %v616 = vpack.c.b16 %v612, %v610
        %v617 = vpack.c.b16 %v613, %v611
        %v654 = vunpack.c.l.b16 %v469
        %v655 = vunpack.c.h.b16 %v469
        %v656 = vunpack.c.l.b16 %v470
        %v657 = vunpack.c.h.b16 %v470
        %v658 = vunpack.c.l.b16 %v471
        %v659 = vunpack.c.h.b16 %v471
        %v660 = vunpack.c.l.b16 %v472
        %v661 = vunpack.c.h.b16 %v472
        %v662 = vunpack.c.l.b16 %v473
        %v663 = vunpack.c.h.b16 %v473
        %v664 = vunpack.c.l.b16 %v474
        %v665 = vunpack.c.h.b16 %v474
        %v666 = vunpack.c.l.b16 %v475
        %v667 = vunpack.c.h.b16 %v475
        %v668 = vunpack.c.l.b16 %v476
        %v669 = vunpack.c.h.b16 %v476
        %v670 = vunpack.c.l.b16 %v477
        %v671 = vunpack.c.h.b16 %v477
        %v672 = vunpack.c.l.b16 %v478
        %v673 = vunpack.c.h.b16 %v478
        %v674 = vunpack.c.l.b16 %v479
        %v675 = vunpack.c.h.b16 %v479
        %v676 = vunpack.c.l.b16 %v480
        %v677 = vunpack.c.h.b16 %v480
        %v678 = vunpack.c.l.b16 %v481
        %v679 = vunpack.c.h.b16 %v481
        %v680 = vunpack.c.l.b16 %v482
        %v681 = vunpack.c.h.b16 %v482
        %v682 = vunpack.c.l.b16 %v483
        %v683 = vunpack.c.h.b16 %v483
        %v684 = vunpack.c.l.b16 %v484
        %v685 = vunpack.c.h.b16 %v484
        %v686 = vunpack.c.l.b16 %v485
        %v687 = vunpack.c.h.b16 %v485
        %v688 = vunpack.c.l.b16 %v486
        %v689 = vunpack.c.h.b16 %v486
        %v690 = vunpack.c.l.b16 %v487
        %v691 = vunpack.c.h.b16 %v487
        %v692 = vunpack.c.l.b16 %v488
        %v693 = vunpack.c.h.b16 %v488
        %v694 = vunpack.c.l.b16 %v489
        %v695 = vunpack.c.h.b16 %v489
        %v696 = vunpack.c.l.b16 %v490
        %v697 = vunpack.c.h.b16 %v490
        %v698 = vunpack.c.l.b16 %v491
        %v699 = vunpack.c.h.b16 %v491
        %v700 = vunpack.c.l.b16 %v492
        %v701 = vunpack.c.h.b16 %v492
        %v702 = vunpack.c.l.b16 %v493
        %v703 = vunpack.c.h.b16 %v493
        %v704 = vunpack.c.l.b16 %v494
        %v705 = vunpack.c.h.b16 %v494
        %v706 = vunpack.c.l.b16 %v495
        %v707 = vunpack.c.h.b16 %v495
        %v708 = vunpack.c.l.b16 %v496
        %v709 = vunpack.c.h.b16 %v496
        %v710 = vunpack.c.l.b16 %v497
        %v711 = vunpack.c.h.b16 %v497
        %v712 = vunpack.c.l.b16 %v498
        %v713 = vunpack.c.h.b16 %v498
        %v714 = vunpack.c.l.b16 %v499
        %v715 = vunpack.c.h.b16 %v499
        %v716 = vunpack.c.l.b16 %v500
        %v717 = vunpack.c.h.b16 %v500
        %v718 = vpack.c.b16 %v656, %v654
        %v719 = vpack.c.b16 %v657, %v655
        %v720 = vpack.c.b16 %v660, %v658
        %v721 = vpack.c.b16 %v661, %v659
        %v722 = vpack.c.b16 %v664, %v662
        %v723 = vpack.c.b16 %v665, %v663
        %v724 = vpack.c.b16 %v668, %v666
        %v725 = vpack.c.b16 %v669, %v667
        %v726 = vpack.c.b16 %v672, %v670
        %v727 = vpack.c.b16 %v673, %v671
        %v728 = vpack.c.b16 %v676, %v674
        %v729 = vpack.c.b16 %v677, %v675
        %v730 = vpack.c.b16 %v680, %v678
        %v731 = vpack.c.b16 %v681, %v679
        %v732 = vpack.c.b16 %v684, %v682
        %v733 = vpack.c.b16 %v685, %v683
        %v734 = vpack.c.b16 %v688, %v686
        %v735 = vpack.c.b16 %v689, %v687
        %v736 = vpack.c.b16 %v692, %v690
        %v737 = vpack.c.b16 %v693, %v691
        %v738 = vpack.c.b16 %v696, %v694
        %v739 = vpack.c.b16 %v697, %v695
        %v740 = vpack.c.b16 %v700, %v698
        %v741 = vpack.c.b16 %v701, %v699
        %v742 = vpack.c.b16 %v704, %v702
        %v743 = vpack.c.b16 %v705, %v703
        %v744 = vpack.c.b16 %v708, %v706
        %v745 = vpack.c.b16 %v709, %v707
        %v746 = vpack.c.b16 %v712, %v710
        %v747 = vpack.c.b16 %v713, %v711
        %v748 = vpack.c.b16 %v716, %v714
        %v749 = vpack.c.b16 %v717, %v715
        %782 = vmatprep.subr.bf16.mxu0 %v733
        %783 = vmatpush1.bf16.msra.mxu0 %v732
        %784 = vmatprep.subr.bf16.mxu0 %v731
        %785 = vmatpush1.bf16.msra.mxu0 %v730
        %786 = vmatprep.subr.bf16.mxu0 %v729
        %787 = vmatpush1.bf16.msra.mxu0 %v728
        %788 = vmatprep.subr.bf16.mxu0 %v727
        %789 = vmatpush1.bf16.msra.mxu0 %v726
        %790 = vmatprep.subr.bf16.mxu0 %v725
        %791 = vmatpush1.bf16.msra.mxu0 %v724
        %792 = vmatprep.subr.bf16.mxu0 %v723
        %793 = vmatpush1.bf16.msra.mxu0 %v722
        %794 = vmatprep.subr.bf16.mxu0 %v721
        %795 = vmatpush1.bf16.msra.mxu0 %v720
        %796 = vmatprep.subr.bf16.mxu0 %v719
        %797 = vmatpush1.bf16.msra.mxu0 %v718
        %798 = vmatprep.subr.bf16.mxu0 %v749
        %799 = vmatpush2.bf16.msra.mxu0 %v748
        %800 = vmatprep.subr.bf16.mxu0 %v747
        %801 = vmatpush2.bf16.msra.mxu0 %v746
        %802 = vmatprep.subr.bf16.mxu0 %v745
        %803 = vmatpush2.bf16.msra.mxu0 %v744
        %804 = vmatprep.subr.bf16.mxu0 %v743
        %805 = vmatpush2.bf16.msra.mxu0 %v742
        %806 = vmatprep.subr.bf16.mxu0 %v741
        %807 = vmatpush2.bf16.msra.mxu0 %v740
        %808 = vmatprep.subr.bf16.mxu0 %v739
        %809 = vmatpush2.bf16.msra.mxu0 %v738
        %810 = vmatprep.subr.bf16.mxu0 %v737
        %811 = vmatpush2.bf16.msra.mxu0 %v736
        %812 = vmatprep.subr.bf16.mxu0 %v735
        %813 = vmatpush2.bf16.msra.mxu0 %v734
        %814 = vmatprep.mubr.bf16.mxu0 %v615
        %815 = vmatmul.mubr.bf16.gmra.mxu0 %v614
        %v816 = vpop.f32.mrf.mxu0
        %v817 = vadd.f32 %v584, %v816
        %v818 = vpop.f32.mrf.mxu0
        %v819 = vadd.f32 %v586, %v818
        %v820 = vpop.f32.mrf.mxu0
        %v821 = vadd.f32 %v588, %v820
        %v822 = vpop.f32.mrf.mxu0
        %v823 = vadd.f32 %v590, %v822
        %824 = vmatprep.mubr.bf16.mxu0 %v617
        %825 = vmatmul.mubr.bf16.gmra.mxu0 %v616
        %v826 = vpop.f32.mrf.mxu0
        %v827 = vadd.f32 %v594, %v826
        %v828 = vpop.f32.mrf.mxu0
        %v829 = vadd.f32 %v596, %v828
        %v830 = vpop.f32.mrf.mxu0
        %v831 = vadd.f32 %v598, %v830
        %v832 = vpop.f32.mrf.mxu0
        %v833 = vadd.f32 %v600, %v832
        %834 = vdwg.mxu0
        %v835 = vpack.c.bf16 %v821, %v817
        %v836 = vpack.c.bf16 %v823, %v819
        %v837 = vpack.c.bf16 %v831, %v827
        %v838 = vpack.c.bf16 %v833, %v829
        %v839 = vtanh.bf16.pop %v835
        %v840 = vtanh.bf16.pop %v836
        %v841 = vtanh.bf16.pop %v837
        %v842 = vtanh.bf16.pop %v838
        %v843 = vld [vmem:[#allocation2] sm:$0xff]
        %v844 = vld [vmem:[#allocation2 + $0x8] sm:$0xff]
        %v845 = vld [vmem:[#allocation2 + $0x10] sm:$0xff]
        %v846 = vld [vmem:[#allocation2 + $0x18] sm:$0xff]
        %v847 = vld [vmem:[#allocation2 + $0x20] sm:$0xff]
        %v848 = vld [vmem:[#allocation2 + $0x28] sm:$0xff]
        %v849 = vld [vmem:[#allocation2 + $0x30] sm:$0xff]
        %v850 = vld [vmem:[#allocation2 + $0x38] sm:$0xff]
        %v851 = vld [vmem:[%s393] sm:$0xff]
        %v852 = vld [vmem:[%s393 + $0x8] sm:$0xff]
        %v853 = vld [vmem:[%s393 + $0x10] sm:$0xff]
        %v854 = vld [vmem:[%s393 + $0x18] sm:$0xff]
        %v855 = vld [vmem:[%s393 + $0x20] sm:$0xff]
        %v856 = vld [vmem:[%s393 + $0x28] sm:$0xff]
        %v857 = vld [vmem:[%s393 + $0x30] sm:$0xff]
        %v858 = vld [vmem:[%s393 + $0x38] sm:$0xff]
        %v859 = vld [vmem:[%s393 + $0x40] sm:$0xff]
        %v860 = vld [vmem:[%s393 + $0x48] sm:$0xff]
        %v861 = vld [vmem:[%s393 + $0x50] sm:$0xff]
        %v862 = vld [vmem:[%s393 + $0x58] sm:$0xff]
        %v863 = vld [vmem:[%s393 + $0x60] sm:$0xff]
        %v864 = vld [vmem:[%s393 + $0x68] sm:$0xff]
        %v865 = vld [vmem:[%s393 + $0x70] sm:$0xff]
        %v866 = vld [vmem:[%s393 + $0x78] sm:$0xff]
        %v867 = vld [vmem:[%s393 + $0x80] sm:$0xff]
        %v868 = vld [vmem:[%s393 + $0x88] sm:$0xff]
        %v869 = vld [vmem:[%s393 + $0x90] sm:$0xff]
        %v870 = vld [vmem:[%s393 + $0x98] sm:$0xff]
        %v871 = vld [vmem:[%s393 + $0xa0] sm:$0xff]
        %v872 = vld [vmem:[%s393 + $0xa8] sm:$0xff]
        %v873 = vld [vmem:[%s393 + $0xb0] sm:$0xff]
        %v874 = vld [vmem:[%s393 + $0xb8] sm:$0xff]
        %v875 = vld [vmem:[%s393 + $0xc0] sm:$0xff]
        %v876 = vld [vmem:[%s393 + $0xc8] sm:$0xff]
        %v877 = vld [vmem:[%s393 + $0xd0] sm:$0xff]
        %v878 = vld [vmem:[%s393 + $0xd8] sm:$0xff]
        %v879 = vld [vmem:[%s393 + $0xe0] sm:$0xff]
        %v880 = vld [vmem:[%s393 + $0xe8] sm:$0xff]
        %v881 = vld [vmem:[%s393 + $0xf0] sm:$0xff]
        %v882 = vld [vmem:[%s393 + $0xf8] sm:$0xff]
        %v915 = vunpack.c.l.b16 %v851
        %v916 = vunpack.c.h.b16 %v851
        %v917 = vunpack.c.l.b16 %v852
        %v918 = vunpack.c.h.b16 %v852
        %v919 = vunpack.c.l.b16 %v853
        %v920 = vunpack.c.h.b16 %v853
        %v921 = vunpack.c.l.b16 %v854
        %v922 = vunpack.c.h.b16 %v854
        %v923 = vunpack.c.l.b16 %v855
        %v924 = vunpack.c.h.b16 %v855
        %v925 = vunpack.c.l.b16 %v856
        %v926 = vunpack.c.h.b16 %v856
        %v927 = vunpack.c.l.b16 %v857
        %v928 = vunpack.c.h.b16 %v857
        %v929 = vunpack.c.l.b16 %v858
        %v930 = vunpack.c.h.b16 %v858
        %v931 = vunpack.c.l.b16 %v859
        %v932 = vunpack.c.h.b16 %v859
        %v933 = vunpack.c.l.b16 %v860
        %v934 = vunpack.c.h.b16 %v860
        %v935 = vunpack.c.l.b16 %v861
        %v936 = vunpack.c.h.b16 %v861
        %v937 = vunpack.c.l.b16 %v862
        %v938 = vunpack.c.h.b16 %v862
        %v939 = vunpack.c.l.b16 %v863
        %v940 = vunpack.c.h.b16 %v863
        %v941 = vunpack.c.l.b16 %v864
        %v942 = vunpack.c.h.b16 %v864
        %v943 = vunpack.c.l.b16 %v865
        %v944 = vunpack.c.h.b16 %v865
        %v945 = vunpack.c.l.b16 %v866
        %v946 = vunpack.c.h.b16 %v866
        %v947 = vunpack.c.l.b16 %v867
        %v948 = vunpack.c.h.b16 %v867
        %v949 = vunpack.c.l.b16 %v868
        %v950 = vunpack.c.h.b16 %v868
        %v951 = vunpack.c.l.b16 %v869
        %v952 = vunpack.c.h.b16 %v869
        %v953 = vunpack.c.l.b16 %v870
        %v954 = vunpack.c.h.b16 %v870
        %v955 = vunpack.c.l.b16 %v871
        %v956 = vunpack.c.h.b16 %v871
        %v957 = vunpack.c.l.b16 %v872
        %v958 = vunpack.c.h.b16 %v872
        %v959 = vunpack.c.l.b16 %v873
        %v960 = vunpack.c.h.b16 %v873
        %v961 = vunpack.c.l.b16 %v874
        %v962 = vunpack.c.h.b16 %v874
        %v963 = vunpack.c.l.b16 %v875
        %v964 = vunpack.c.h.b16 %v875
        %v965 = vunpack.c.l.b16 %v876
        %v966 = vunpack.c.h.b16 %v876
        %v967 = vunpack.c.l.b16 %v877
        %v968 = vunpack.c.h.b16 %v877
        %v969 = vunpack.c.l.b16 %v878
        %v970 = vunpack.c.h.b16 %v878
        %v971 = vunpack.c.l.b16 %v879
        %v972 = vunpack.c.h.b16 %v879
        %v973 = vunpack.c.l.b16 %v880
        %v974 = vunpack.c.h.b16 %v880
        %v975 = vunpack.c.l.b16 %v881
        %v976 = vunpack.c.h.b16 %v881
        %v977 = vunpack.c.l.b16 %v882
        %v978 = vunpack.c.h.b16 %v882
        %v979 = vpack.c.b16 %v917, %v915
        %v980 = vpack.c.b16 %v918, %v916
        %v981 = vpack.c.b16 %v921, %v919
        %v982 = vpack.c.b16 %v922, %v920
        %v983 = vpack.c.b16 %v925, %v923
        %v984 = vpack.c.b16 %v926, %v924
        %v985 = vpack.c.b16 %v929, %v927
        %v986 = vpack.c.b16 %v930, %v928
        %v987 = vpack.c.b16 %v933, %v931
        %v988 = vpack.c.b16 %v934, %v932
        %v989 = vpack.c.b16 %v937, %v935
        %v990 = vpack.c.b16 %v938, %v936
        %v991 = vpack.c.b16 %v941, %v939
        %v992 = vpack.c.b16 %v942, %v940
        %v993 = vpack.c.b16 %v945, %v943
        %v994 = vpack.c.b16 %v946, %v944
        %v995 = vpack.c.b16 %v949, %v947
        %v996 = vpack.c.b16 %v950, %v948
        %v997 = vpack.c.b16 %v953, %v951
        %v998 = vpack.c.b16 %v954, %v952
        %v999 = vpack.c.b16 %v957, %v955
        %v1000 = vpack.c.b16 %v958, %v956
        %v1001 = vpack.c.b16 %v961, %v959
        %v1002 = vpack.c.b16 %v962, %v960
        %v1003 = vpack.c.b16 %v965, %v963
        %v1004 = vpack.c.b16 %v966, %v964
        %v1005 = vpack.c.b16 %v969, %v967
        %v1006 = vpack.c.b16 %v970, %v968
        %v1007 = vpack.c.b16 %v973, %v971
        %v1008 = vpack.c.b16 %v974, %v972
        %v1009 = vpack.c.b16 %v977, %v975
        %v1010 = vpack.c.b16 %v978, %v976
        %1043 = vmatprep.subr.bf16.mxu0 %v994
        %1044 = vmatpush1.bf16.msra.mxu0 %v993
        %1045 = vmatprep.subr.bf16.mxu0 %v992
        %1046 = vmatpush1.bf16.msra.mxu0 %v991
        %1047 = vmatprep.subr.bf16.mxu0 %v990
        %1048 = vmatpush1.bf16.msra.mxu0 %v989
        %1049 = vmatprep.subr.bf16.mxu0 %v988
        %1050 = vmatpush1.bf16.msra.mxu0 %v987
        %1051 = vmatprep.subr.bf16.mxu0 %v986
        %1052 = vmatpush1.bf16.msra.mxu0 %v985
        %1053 = vmatprep.subr.bf16.mxu0 %v984
        %1054 = vmatpush1.bf16.msra.mxu0 %v983
        %1055 = vmatprep.subr.bf16.mxu0 %v982
        %1056 = vmatpush1.bf16.msra.mxu0 %v981
        %1057 = vmatprep.subr.bf16.mxu0 %v980
        %1058 = vmatpush1.bf16.msra.mxu0 %v979
        %1059 = vmatprep.subr.bf16.mxu0 %v1010
        %1060 = vmatpush2.bf16.msra.mxu0 %v1009
        %1061 = vmatprep.subr.bf16.mxu0 %v1008
        %1062 = vmatpush2.bf16.msra.mxu0 %v1007
        %1063 = vmatprep.subr.bf16.mxu0 %v1006
        %1064 = vmatpush2.bf16.msra.mxu0 %v1005
        %1065 = vmatprep.subr.bf16.mxu0 %v1004
        %1066 = vmatpush2.bf16.msra.mxu0 %v1003
        %1067 = vmatprep.subr.bf16.mxu0 %v1002
        %1068 = vmatpush2.bf16.msra.mxu0 %v1001
        %1069 = vmatprep.subr.bf16.mxu0 %v1000
        %1070 = vmatpush2.bf16.msra.mxu0 %v999
        %1071 = vmatprep.subr.bf16.mxu0 %v998
        %1072 = vmatpush2.bf16.msra.mxu0 %v997
        %1073 = vmatprep.subr.bf16.mxu0 %v996
        %1074 = vmatpush2.bf16.msra.mxu0 %v995
        %1075 = vmatprep.mubr.bf16.mxu0 %v840
        %1076 = vmatmul.mubr.bf16.gmra.mxu0 %v839
        %v1077 = vpop.f32.mrf.mxu0
        %v1078 = vadd.f32 0.0, %v1077
        %v1079 = vpop.f32.mrf.mxu0
        %v1080 = vadd.f32 0.0, %v1079
        %v1081 = vpop.f32.mrf.mxu0
        %v1082 = vadd.f32 0.0, %v1081
        %v1083 = vpop.f32.mrf.mxu0
        %v1084 = vadd.f32 0.0, %v1083
        %1085 = vmatprep.mubr.bf16.mxu0 %v842
        %1086 = vmatmul.mubr.bf16.gmra.mxu0 %v841
        %v1087 = vpop.f32.mrf.mxu0
        %v1088 = vadd.f32 0.0, %v1087
        %v1089 = vpop.f32.mrf.mxu0
        %v1090 = vadd.f32 0.0, %v1089
        %v1091 = vpop.f32.mrf.mxu0
        %v1092 = vadd.f32 0.0, %v1091
        %v1093 = vpop.f32.mrf.mxu0
        %v1094 = vadd.f32 0.0, %v1093
        %1095 = vdwg.mxu0
        %v1096 = vadd.f32 %v843, %v1078
        %v1097 = vadd.f32 %v844, %v1080
        %v1098 = vadd.f32 %v845, %v1082
        %v1099 = vadd.f32 %v846, %v1084
        %v1100 = vadd.f32 %v847, %v1088
        %v1101 = vadd.f32 %v848, %v1090
        %v1102 = vadd.f32 %v849, %v1092
        %v1103 = vadd.f32 %v850, %v1094
        %1104 = vst [vmem:[#allocation2] sm:$0xff] %v1096
        %1105 = vst [vmem:[#allocation2 + $0x8] sm:$0xff] %v1097
        %1106 = vst [vmem:[#allocation2 + $0x10] sm:$0xff] %v1098
        %1107 = vst [vmem:[#allocation2 + $0x18] sm:$0xff] %v1099
        %1108 = vst [vmem:[#allocation2 + $0x20] sm:$0xff] %v1100
        %1109 = vst [vmem:[#allocation2 + $0x28] sm:$0xff] %v1101
        %1110 = vst [vmem:[#allocation2 + $0x30] sm:$0xff] %v1102
        %1111 = vst [vmem:[#allocation2 + $0x38] sm:$0xff] %v1103
        %p1112 = scmp.eq.s32.totalorder %s31, 1
        // Predicated region
        $region99: #{tpu_custom_call.1} parent=77 // pred_check
          %p1113 = pneg %p1112
        $region100: #{tpu_custom_call.1} parent=77 // pred_check_branch
          %1115 = sbr.rel (%p1113) target = $region102
        $region101: #{tpu_custom_call.1} parent=77 // pred_region
          %v1116 = vld [vmem:[#allocation2] sm:$0xff]
          %v1117 = vld [vmem:[#allocation2 + $0x8] sm:$0xff]
          %v1118 = vld [vmem:[#allocation2 + $0x10] sm:$0xff]
          %v1119 = vld [vmem:[#allocation2 + $0x18] sm:$0xff]
          %v1120 = vld [vmem:[#allocation2 + $0x20] sm:$0xff]
          %v1121 = vld [vmem:[#allocation2 + $0x28] sm:$0xff]
          %v1122 = vld [vmem:[#allocation2 + $0x30] sm:$0xff]
          %v1123 = vld [vmem:[#allocation2 + $0x38] sm:$0xff]
          %v1124 = vld [vmem:[%s5] sm:$0x3]
          %v1126 = vlaneseq
          %v1127 = vshrl.u32 %v1126, 7
          %v1128 = vsub.s32 0, %v1127
          %v1129 = vrot.slane %v1124, %v1128
          %v1130 = vlaneseq
          %v1131 = vshrl.u32 %v1130, 7
          %v1132 = vsub.s32 1, %v1131
          %v1133 = vrot.slane %v1124, %v1132
          %v1136 = vadd.f32 %v1116, %v1129
          %v1137 = vadd.f32 %v1117, %v1133
          %v1138 = vadd.f32 %v1118, %v1129
          %v1139 = vadd.f32 %v1119, %v1133
          %v1140 = vadd.f32 %v1120, %v1129
          %v1141 = vadd.f32 %v1121, %v1133
          %v1142 = vadd.f32 %v1122, %v1129
          %v1143 = vadd.f32 %v1123, %v1133
          %1144 = vst [vmem:[%s440] sm:$0xff] %v1136
          %1145 = vst [vmem:[%s440 + $0x8] sm:$0xff] %v1137
          %1146 = vst [vmem:[%s440 + $0x10] sm:$0xff] %v1138
          %1147 = vst [vmem:[%s440 + $0x18] sm:$0xff] %v1139
          %1148 = vst [vmem:[%s440 + $0x20] sm:$0xff] %v1140
          %1149 = vst [vmem:[%s440 + $0x28] sm:$0xff] %v1141
          %1150 = vst [vmem:[%s440 + $0x30] sm:$0xff] %v1142
          %1151 = vst [vmem:[%s440 + $0x38] sm:$0xff] %v1143
        $region102: #{tpu_custom_call.1} parent=77 // pred_fallthru
          _
        %s1152 = sand.u32 %s197, 1
        %s1153 = scalar_lea.sflag [#allocation5], %s1152
        %s1154 = sand.u32 %s197, 1
        %s1155 = smul.addr %s1154, 64
        %s1156 = scalar_lea.vmem [#allocation10], %s1155
        // Predicated region
        $region103: #{tpu_custom_call.1} parent=77 // pred_check
          %p1157 = pneg %p207
        $region104: #{tpu_custom_call.1} parent=77 // pred_check_branch
          %1159 = sbr.rel (%p1157) target = $region106
        $region105: #{tpu_custom_call.1} parent=77 // pred_region
          %s1160 = smul.u32 4, %s30
          %s1162 = ssub.s32 1024, 1024
          %1163 = vsyncadd %s1153, %s1162
          %s1164 = smul.addr %s1160, 2
          %s1165 = smul.addr %s1164, 128
          %s1166 = scalar_lea.hbm %s6, %s1165
          %s1167 = sshll.u32 %s1156, 4
          %s1168 = int_to_ptr.vmem [resolvable:$true] %s1167
          %1173 = dma.vmem_to_hbm [thread:$0]  %s1168, 1024, %s1166, %s1153, 256, 256, 16
        $region106: #{tpu_custom_call.1} parent=77 // pred_fallthru
          _
      $region78: #{tpu_custom_call.1} parent=5 // pred_fallthru
        _
      %p1174 = scmp.le.s32.totalorder 2, %s21
      // Predicated region
      $region107: #{tpu_custom_call.1} parent=5 // pred_check
        %p1175 = pneg %p1174
      $region108: #{tpu_custom_call.1} parent=5 // pred_check_branch
        %1177 = sbr.rel (%p1175) target = $region110
      $region109: #{tpu_custom_call.1} parent=5 // pred_region
        %s1178 = ssub.s32 %s21, 2
        // Predicated region
        $region111: #{tpu_custom_call.1} parent=109 // pred_check
          %p1179 = pneg %p213
        $region112: #{tpu_custom_call.1} parent=109 // pred_check_branch
          %1181 = sbr.rel (%p1179) target = $region114
        $region113: #{tpu_custom_call.1} parent=109 // pred_region
          %s1182 = sand.u32 %s198, 1
          %s1183 = scalar_lea.sflag [#allocation5], %s1182
          %s1184 = sand.u32 %s198, 1
          %s1185 = smul.addr %s1184, 64
          %s1186 = scalar_lea.vmem [#allocation10], %s1185
          %1187 = dma.done %s1183, 1024
        $region114: #{tpu_custom_call.1} parent=109 // pred_fallthru
          _
      $region110: #{tpu_custom_call.1} parent=5 // pred_fallthru
        _
    $region6: #{tpu_custom_call.1} parent=1 // loop_footer
      %s25 = sadd.s32 1, %s21
    $region7: #{tpu_custom_call.1} parent=1 // loop_footer_branch
      %20 = sbr.rel target = $region3
    $region8: #{tpu_custom_call.1} parent=1 // loop_exit
      _
    %1188 = vsyncpa [#allocation4], 1
    %s1189 = scalar_lea.sflag [#allocation4], 1
    %1190 = vsyncpa %s1189, 1
    %1191 = vsyncpa [#allocation7], 1
    %s1192 = scalar_lea.sflag [#allocation7], 1
    %1193 = vsyncpa %s1192, 1
    %1194 = vsyncpa [#allocation5], 1
    %s1195 = scalar_lea.sflag [#allocation5], 1
    %1196 = vsyncpa %s1195, 1

</llo_original>
